<compile_context>
chip_gen: v7x
topology: tpu7x:2x2x1
jax: 0.10.0
libtpu: 0.0.40
codegen_flags: <defaults>
</compile_context>

<pallas_src>
import jax
import jax.numpy as jnp
from jax.experimental import pallas as pl
from jax.experimental.pallas import tpu as pltpu

LANE = 128     # lane width -> MXU-friendly padded N for the last layer
SUBLANE = 8    # f32 sublane granularity for the batch tile


def _round_up(x: int, m: int) -> int:
    return ((x + m - 1) // m) * m


def _layer(h_bf16, w_ref, b_ref, *, relu):
    # bf16 operands on the MXU, f32 accumulation; bias + ReLU in f32 on the VPU.
    acc = jnp.dot(h_bf16, w_ref[...], preferred_element_type=jnp.float32)
    acc = acc + b_ref[...]
    if relu:
        acc = jnp.maximum(acc, 0.0)
    return acc


def dqn_kernel(x_ref,
               w1_ref, b1_ref,
               w2_ref, b2_ref,
               w3_ref, b3_ref,
               w4_ref, b4_ref,
               w5_ref, b5_ref,
               o_ref):
    h = x_ref[...].astype(jnp.bfloat16)
    h = _layer(h, w1_ref, b1_ref, relu=True).astype(jnp.bfloat16)
    h = _layer(h, w2_ref, b2_ref, relu=True).astype(jnp.bfloat16)
    h = _layer(h, w3_ref, b3_ref, relu=True).astype(jnp.bfloat16)
    h = _layer(h, w4_ref, b4_ref, relu=True).astype(jnp.bfloat16)
    acc = _layer(h, w5_ref, b5_ref, relu=False)          # (TB, out_pad) f32
    # Store only the real n_actions columns back to HBM (no write amplification).
    o_ref[...] = acc[:, :o_ref.shape[1]].astype(o_ref.dtype)


def prepare_params(params):
    """One-time weight preparation, hoisted out of the jitted forward.

    params: list of 5 (W, b), W (in, out) f32, b (out,) or (1, out) f32.
    Returns (prepped, n_actions) where prepped is a tuple of (W_bf16, b_f32)
    with the LAST layer zero-padded to a multiple of 128 output columns
    (lane-aligned N for the MXU).  Reuse the result across forward calls.
    """
    n_actions = params[-1][0].shape[1]
    out_pad = max(LANE, _round_up(n_actions, LANE))
    prepped = []
    last = len(params) - 1
    for i, (w, b) in enumerate(params):
        w = jnp.asarray(w)
        b = jnp.asarray(b).reshape(1, -1)
        if i == last and w.shape[1] != out_pad:
            w = jnp.pad(w, ((0, 0), (0, out_pad - w.shape[1])))
            b = jnp.pad(b, ((0, 0), (0, out_pad - b.shape[1])))
        prepped.append((w.astype(jnp.bfloat16), b.astype(jnp.float32)))
    return tuple(prepped), n_actions


def _choose_tiling(B, tile_b):
    """Pick (TB, n_steps).  Always >= 2 steps and an even step count so a v7x
    megacore ("parallel" batch axis) splits work evenly across both
    TensorCores; TB is sublane-aligned and capped at tile_b."""
    tb_cap = max(_round_up(tile_b, SUBLANE), SUBLANE)
    n_steps = max(2, -(-B // tb_cap))
    if n_steps % 2:
        n_steps += 1
    TB = _round_up(-(-B // n_steps), SUBLANE)
    return TB, n_steps


def _dqn_forward(x, prepped, *, n_actions, tile_b=1024):
    """x: (B, n_observations) f32.  prepped: output of prepare_params()."""
    B, n_obs = x.shape

    TB, n_steps = _choose_tiling(B, tile_b)
    B_pad = TB * n_steps
    x_pad = x if B_pad == B else jnp.pad(x, ((0, B_pad - B), (0, 0)))

    const_map = lambda i: (0, 0)     # weights/biases: same block every step -> VMEM-resident
    in_specs = [pl.BlockSpec((TB, n_obs), lambda i: (i, 0))]
    flat = []
    for w, b in prepped:
        flat += [w, b]
        in_specs.append(pl.BlockSpec(w.shape, const_map))
        in_specs.append(pl.BlockSpec(b.shape, const_map))

    cp_kwargs = dict(dimension_semantics=("parallel",))   # v7x: shard tiles across both TCs
    if TB > 1024:
        # v5e's default scoped-VMEM limit is 16 MiB; give headroom for big tiles.
        cp_kwargs["vmem_limit_bytes"] = 32 * 1024 * 1024

    out = pl.pallas_call(
        dqn_kernel,
        grid=(n_steps,),
        in_specs=in_specs,
        out_specs=pl.BlockSpec((TB, n_actions), lambda i: (i, 0)),
        out_shape=jax.ShapeDtypeStruct((B_pad, n_actions), jnp.float32),
        compiler_params=pltpu.CompilerParams(**cp_kwargs),
    )(x_pad, *flat)

    return out[:B]


dqn_forward = jax.jit(_dqn_forward, static_argnames=("n_actions", "tile_b"))


def init_params(key, n_observations, n_actions, hidden=256):
    """Deterministic init mimicking nn.Linear's uniform(-1/sqrt(fan_in), 1/sqrt(fan_in))."""
    dims = [n_observations, hidden, hidden, hidden, hidden, n_actions]
    params = []
    for i in range(5):
        key, kw, kb = jax.random.split(key, 3)
        fan_in, fan_out = dims[i], dims[i + 1]
        bound = 1.0 / (fan_in ** 0.5)
        w = jax.random.uniform(kw, (fan_in, fan_out), jnp.float32, -bound, bound)
        b = jax.random.uniform(kb, (1, fan_out), jnp.float32, -bound, bound)
        params.append((w, b))
    return params


def dqn_reference_f32(x, params):
    h = x
    for i, (w, b) in enumerate(params):
        h = h @ w + b
        if i < len(params) - 1:
            h = jnp.maximum(h, 0.0)
    return h


def dqn_reference_bf16(x, params):
    # Mirrors the kernel's dtype strategy: bf16 matmul operands, f32 accumulate,
    # bias + ReLU in f32.
    h = x.astype(jnp.bfloat16)
    for i, (w, b) in enumerate(params):
        acc = jnp.dot(h, w.astype(jnp.bfloat16),
                      preferred_element_type=jnp.float32) + b
        if i < len(params) - 1:
            h = jnp.maximum(acc, 0.0).astype(jnp.bfloat16)
        else:
            h = acc
    return h


if __name__ == "__main__":
    n_observations = 8
    n_actions = 4
    batch = 2

    key = jax.random.PRNGKey(0)
    key, kx = jax.random.split(key)
    x = jax.random.normal(kx, (batch, n_observations), jnp.float32)
    params = init_params(key, n_observations, n_actions)

    # Weight prep is done ONCE, outside the jitted forward (perf feedback #3).
    prepped, na = prepare_params(params)

    out = dqn_forward(x, prepped, n_actions=na)
    out = jax.block_until_ready(out)
    assert out.shape == (batch, n_actions)

    # Check against a reference with the same bf16/f32 strategy (tight) and the
    # pure-f32 reference (loose, bf16 weight quantization error).
    assert jnp.allclose(out, dqn_reference_bf16(x, params), atol=1e-2, rtol=1e-2)
    assert jnp.allclose(out, dqn_reference_f32(x, params), atol=5e-2, rtol=5e-2)

    # Second call with a larger, non-multiple batch to exercise multi-step grid,
    # batch padding, the even-step v7x clamp, and double-buffered x/out DMA.
    x_big = jax.random.normal(jax.random.PRNGKey(1), (1000, n_observations), jnp.float32)
    out_big = jax.block_until_ready(dqn_forward(x_big, prepped, n_actions=na))
    assert out_big.shape == (1000, n_actions)
    assert jnp.allclose(out_big, dqn_reference_bf16(x_big, params), atol=1e-2, rtol=1e-2)

    print("KERNEL_OK")
</pallas_src>

<mosaic_0001>
module attributes {stable_mosaic.version = 11 : i64} {
  func.func @dqn_kernel(%arg0: i32, %arg1: memref<8x8xf32, #tpu.memory_space<vmem>>, %arg2: memref<8x256xbf16, #tpu.memory_space<vmem>>, %arg3: memref<1x256xf32, #tpu.memory_space<vmem>>, %arg4: memref<256x256xbf16, #tpu.memory_space<vmem>>, %arg5: memref<1x256xf32, #tpu.memory_space<vmem>>, %arg6: memref<256x256xbf16, #tpu.memory_space<vmem>>, %arg7: memref<1x256xf32, #tpu.memory_space<vmem>>, %arg8: memref<256x256xbf16, #tpu.memory_space<vmem>>, %arg9: memref<1x256xf32, #tpu.memory_space<vmem>>, %arg10: memref<256x128xbf16, #tpu.memory_space<vmem>>, %arg11: memref<1x128xf32, #tpu.memory_space<vmem>>, %arg12: memref<8x4xf32, #tpu.memory_space<vmem>>) attributes {dimension_semantics = [#tpu.dimension_semantics<parallel>], iteration_bounds = array<i64: 2>, scalar_prefetch = 0 : i64, scratch_operands = 0 : i64, tpu.core_type = #tpu.core_type<tc>, window_params = [{transform_indices = @transform_0, window_bounds = array<i64: 8, 8>}, {pipeline_mode = #tpu.pipeline_mode<synchronous>, transform_indices = @transform_1, window_bounds = array<i64: 8, 256>}, {pipeline_mode = #tpu.pipeline_mode<synchronous>, transform_indices = @transform_2, window_bounds = array<i64: 1, 256>}, {pipeline_mode = #tpu.pipeline_mode<synchronous>, transform_indices = @transform_3, window_bounds = array<i64: 256, 256>}, {pipeline_mode = #tpu.pipeline_mode<synchronous>, transform_indices = @transform_4, window_bounds = array<i64: 1, 256>}, {pipeline_mode = #tpu.pipeline_mode<synchronous>, transform_indices = @transform_5, window_bounds = array<i64: 256, 256>}, {pipeline_mode = #tpu.pipeline_mode<synchronous>, transform_indices = @transform_6, window_bounds = array<i64: 1, 256>}, {pipeline_mode = #tpu.pipeline_mode<synchronous>, transform_indices = @transform_7, window_bounds = array<i64: 256, 256>}, {pipeline_mode = #tpu.pipeline_mode<synchronous>, transform_indices = @transform_8, window_bounds = array<i64: 1, 256>}, {pipeline_mode = #tpu.pipeline_mode<synchronous>, transform_indices = @transform_9, window_bounds = array<i64: 256, 128>}, {pipeline_mode = #tpu.pipeline_mode<synchronous>, transform_indices = @transform_10, window_bounds = array<i64: 1, 128>}, {transform_indices = @transform_11, window_bounds = array<i64: 8, 4>}]} {
    %c0 = arith.constant 0 : index
    %c0_0 = arith.constant 0 : index
    %0 = vector.load %arg1[%c0, %c0_0] : memref<8x8xf32, #tpu.memory_space<vmem>>, vector<8x8xf32>
    %1 = arith.truncf %0 : vector<8x8xf32> to vector<8x8xbf16>
    %c0_1 = arith.constant 0 : index
    %c0_2 = arith.constant 0 : index
    %2 = vector.load %arg2[%c0_1, %c0_2] : memref<8x256xbf16, #tpu.memory_space<vmem>>, vector<8x256xbf16>
    %cst = arith.constant dense<0.000000e+00> : vector<8x256xf32>
    %3 = tpu.matmul %1, %2, %cst {dimension_numbers = #tpu.dot_dimension_numbers<[1], [0], [0], [1], [0, 0, 1, 1], [], []>} : vector<8x8xbf16>, vector<8x256xbf16>, vector<8x256xf32> -> vector<8x256xf32>
    %c0_3 = arith.constant 0 : index
    %c0_4 = arith.constant 0 : index
    %4 = vector.load %arg3[%c0_3, %c0_4] : memref<1x256xf32, #tpu.memory_space<vmem>>, vector<1x256xf32>
    %5 = vector.broadcast %4 : vector<1x256xf32> to vector<8x256xf32>
    %6 = arith.addf %3, %5 : vector<8x256xf32>
    %cst_5 = arith.constant 0.000000e+00 : f32
    %7 = vector.broadcast %cst_5 : f32 to vector<8x256xf32>
    %8 = arith.maximumf %6, %7 : vector<8x256xf32>
    %9 = arith.truncf %8 : vector<8x256xf32> to vector<8x256xbf16>
    %c0_6 = arith.constant 0 : index
    %c0_7 = arith.constant 0 : index
    %10 = vector.load %arg4[%c0_6, %c0_7] : memref<256x256xbf16, #tpu.memory_space<vmem>>, vector<256x256xbf16>
    %cst_8 = arith.constant dense<0.000000e+00> : vector<8x256xf32>
    %11 = tpu.matmul %9, %10, %cst_8 {dimension_numbers = #tpu.dot_dimension_numbers<[1], [0], [0], [1], [0, 0, 1, 1], [], []>} : vector<8x256xbf16>, vector<256x256xbf16>, vector<8x256xf32> -> vector<8x256xf32>
    %c0_9 = arith.constant 0 : index
    %c0_10 = arith.constant 0 : index
    %12 = vector.load %arg5[%c0_9, %c0_10] : memref<1x256xf32, #tpu.memory_space<vmem>>, vector<1x256xf32>
    %13 = vector.broadcast %12 : vector<1x256xf32> to vector<8x256xf32>
    %14 = arith.addf %11, %13 : vector<8x256xf32>
    %cst_11 = arith.constant 0.000000e+00 : f32
    %15 = vector.broadcast %cst_11 : f32 to vector<8x256xf32>
    %16 = arith.maximumf %14, %15 : vector<8x256xf32>
    %17 = arith.truncf %16 : vector<8x256xf32> to vector<8x256xbf16>
    %c0_12 = arith.constant 0 : index
    %c0_13 = arith.constant 0 : index
    %18 = vector.load %arg6[%c0_12, %c0_13] : memref<256x256xbf16, #tpu.memory_space<vmem>>, vector<256x256xbf16>
    %cst_14 = arith.constant dense<0.000000e+00> : vector<8x256xf32>
    %19 = tpu.matmul %17, %18, %cst_14 {dimension_numbers = #tpu.dot_dimension_numbers<[1], [0], [0], [1], [0, 0, 1, 1], [], []>} : vector<8x256xbf16>, vector<256x256xbf16>, vector<8x256xf32> -> vector<8x256xf32>
    %c0_15 = arith.constant 0 : index
    %c0_16 = arith.constant 0 : index
    %20 = vector.load %arg7[%c0_15, %c0_16] : memref<1x256xf32, #tpu.memory_space<vmem>>, vector<1x256xf32>
    %21 = vector.broadcast %20 : vector<1x256xf32> to vector<8x256xf32>
    %22 = arith.addf %19, %21 : vector<8x256xf32>
    %cst_17 = arith.constant 0.000000e+00 : f32
    %23 = vector.broadcast %cst_17 : f32 to vector<8x256xf32>
    %24 = arith.maximumf %22, %23 : vector<8x256xf32>
    %25 = arith.truncf %24 : vector<8x256xf32> to vector<8x256xbf16>
    %c0_18 = arith.constant 0 : index
    %c0_19 = arith.constant 0 : index
    %26 = vector.load %arg8[%c0_18, %c0_19] : memref<256x256xbf16, #tpu.memory_space<vmem>>, vector<256x256xbf16>
    %cst_20 = arith.constant dense<0.000000e+00> : vector<8x256xf32>
    %27 = tpu.matmul %25, %26, %cst_20 {dimension_numbers = #tpu.dot_dimension_numbers<[1], [0], [0], [1], [0, 0, 1, 1], [], []>} : vector<8x256xbf16>, vector<256x256xbf16>, vector<8x256xf32> -> vector<8x256xf32>
    %c0_21 = arith.constant 0 : index
    %c0_22 = arith.constant 0 : index
    %28 = vector.load %arg9[%c0_21, %c0_22] : memref<1x256xf32, #tpu.memory_space<vmem>>, vector<1x256xf32>
    %29 = vector.broadcast %28 : vector<1x256xf32> to vector<8x256xf32>
    %30 = arith.addf %27, %29 : vector<8x256xf32>
    %cst_23 = arith.constant 0.000000e+00 : f32
    %31 = vector.broadcast %cst_23 : f32 to vector<8x256xf32>
    %32 = arith.maximumf %30, %31 : vector<8x256xf32>
    %33 = arith.truncf %32 : vector<8x256xf32> to vector<8x256xbf16>
    %c0_24 = arith.constant 0 : index
    %c0_25 = arith.constant 0 : index
    %34 = vector.load %arg10[%c0_24, %c0_25] : memref<256x128xbf16, #tpu.memory_space<vmem>>, vector<256x128xbf16>
    %cst_26 = arith.constant dense<0.000000e+00> : vector<8x128xf32>
    %35 = tpu.matmul %33, %34, %cst_26 {dimension_numbers = #tpu.dot_dimension_numbers<[1], [0], [0], [1], [0, 0, 1, 1], [], []>} : vector<8x256xbf16>, vector<256x128xbf16>, vector<8x128xf32> -> vector<8x128xf32>
    %c0_27 = arith.constant 0 : index
    %c0_28 = arith.constant 0 : index
    %36 = vector.load %arg11[%c0_27, %c0_28] : memref<1x128xf32, #tpu.memory_space<vmem>>, vector<1x128xf32>
    %37 = vector.broadcast %36 : vector<1x128xf32> to vector<8x128xf32>
    %38 = arith.addf %35, %37 : vector<8x128xf32>
    %39 = vector.extract_strided_slice %38 {offsets = [0, 0], sizes = [8, 4], strides = [1, 1]} : vector<8x128xf32> to vector<8x4xf32>
    %c0_29 = arith.constant 0 : index
    %c0_30 = arith.constant 0 : index
    %40 = vector.load %arg12[%c0_29, %c0_30] : memref<8x4xf32, #tpu.memory_space<vmem>>, vector<8x4xf32>
    tpu.vector_store %arg12[%c0_29, %c0_30], %39 {strides = array<i32>} : memref<8x4xf32, #tpu.memory_space<vmem>>, vector<8x4xf32>,
    return
  }
  func.func @transform_0(%arg0: i32) -> (i32, i32) {
    %c0_i32 = arith.constant 0 : i32
    %c0_i32_0 = arith.constant 0 : i32
    return %arg0, %c0_i32 : i32, i32
  }
  func.func @transform_1(%arg0: i32) -> (i32, i32) {
    %c0_i32 = arith.constant 0 : i32
    %c0_i32_0 = arith.constant 0 : i32
    %c0_i32_1 = arith.constant 0 : i32
    return %c0_i32, %c0_i32_0 : i32, i32
  }
  func.func @transform_2(%arg0: i32) -> (i32, i32) {
    %c0_i32 = arith.constant 0 : i32
    %c0_i32_0 = arith.constant 0 : i32
    %c0_i32_1 = arith.constant 0 : i32
    return %c0_i32, %c0_i32_0 : i32, i32
  }
  func.func @transform_3(%arg0: i32) -> (i32, i32) {
    %c0_i32 = arith.constant 0 : i32
    %c0_i32_0 = arith.constant 0 : i32
    %c0_i32_1 = arith.constant 0 : i32
    return %c0_i32, %c0_i32_0 : i32, i32
  }
  func.func @transform_4(%arg0: i32) -> (i32, i32) {
    %c0_i32 = arith.constant 0 : i32
    %c0_i32_0 = arith.constant 0 : i32
    %c0_i32_1 = arith.constant 0 : i32
    return %c0_i32, %c0_i32_0 : i32, i32
  }
  func.func @transform_5(%arg0: i32) -> (i32, i32) {
    %c0_i32 = arith.constant 0 : i32
    %c0_i32_0 = arith.constant 0 : i32
    %c0_i32_1 = arith.constant 0 : i32
    return %c0_i32, %c0_i32_0 : i32, i32
  }
  func.func @transform_6(%arg0: i32) -> (i32, i32) {
    %c0_i32 = arith.constant 0 : i32
    %c0_i32_0 = arith.constant 0 : i32
    %c0_i32_1 = arith.constant 0 : i32
    return %c0_i32, %c0_i32_0 : i32, i32
  }
  func.func @transform_7(%arg0: i32) -> (i32, i32) {
    %c0_i32 = arith.constant 0 : i32
    %c0_i32_0 = arith.constant 0 : i32
    %c0_i32_1 = arith.constant 0 : i32
    return %c0_i32, %c0_i32_0 : i32, i32
  }
  func.func @transform_8(%arg0: i32) -> (i32, i32) {
    %c0_i32 = arith.constant 0 : i32
    %c0_i32_0 = arith.constant 0 : i32
    %c0_i32_1 = arith.constant 0 : i32
    return %c0_i32, %c0_i32_0 : i32, i32
  }
  func.func @transform_9(%arg0: i32) -> (i32, i32) {
    %c0_i32 = arith.constant 0 : i32
    %c0_i32_0 = arith.constant 0 : i32
    %c0_i32_1 = arith.constant 0 : i32
    return %c0_i32, %c0_i32_0 : i32, i32
  }
  func.func @transform_10(%arg0: i32) -> (i32, i32) {
    %c0_i32 = arith.constant 0 : i32
    %c0_i32_0 = arith.constant 0 : i32
    %c0_i32_1 = arith.constant 0 : i32
    return %c0_i32, %c0_i32_0 : i32, i32
  }
  func.func @transform_11(%arg0: i32) -> (i32, i32) {
    %c0_i32 = arith.constant 0 : i32
    %c0_i32_0 = arith.constant 0 : i32
    return %arg0, %c0_i32 : i32, i32
  }
}

</mosaic_0001>

<llo_original>
// kernel: _dqn_forward.1
$region0: #{_dqn_forward.1}
  #allocation0 [shape = 'u32[]', space=smem, size = 0x4, offset = 0x4, fixed_abs, tag = 'smem constant byte address 0x4 - core index']
  #allocation1 [shape = 'u32[144,128]{1,0:T(1,128)}', space=vmem, size = 0x12000, scoped, tag = 'internal scratch']
  %s0 = inlined_call_operand.vmem [shape: f32[16,8], index: 0, kind: input, shape index: {}]
  %s1 = inlined_call_operand.vmem [shape: bf16[8,256], index: 1, kind: input, shape index: {}]
  %s2 = inlined_call_operand.vmem [shape: f32[1,256], index: 2, kind: input, shape index: {}]
  %s3 = inlined_call_operand.hbm [shape: bf16[256,256], index: 3, kind: input, shape index: {}]
  %s4 = inlined_call_operand.vmem [shape: f32[1,256], index: 4, kind: input, shape index: {}]
  %s5 = inlined_call_operand.hbm [shape: bf16[256,256], index: 5, kind: input, shape index: {}]
  %s6 = inlined_call_operand.vmem [shape: f32[1,256], index: 6, kind: input, shape index: {}]
  %s7 = inlined_call_operand.hbm [shape: bf16[256,256], index: 7, kind: input, shape index: {}]
  %s8 = inlined_call_operand.vmem [shape: f32[1,256], index: 8, kind: input, shape index: {}]
  %s9 = inlined_call_operand.hbm [shape: bf16[256,128], index: 9, kind: input, shape index: {}]
  %s10 = inlined_call_operand.vmem [shape: f32[1,128], index: 10, kind: input, shape index: {}]
  %s11 = inlined_call_operand.vmem [shape: f32[16,4], index: 11, kind: output, shape index: {}]
  %s12 = sld [smem:[#allocation0]]
  $region93: #{_dqn_forward.1} parent=0
    _
  %s14 = ssub.s32 1, %s12
  %s15 = scalar_select 0, %s14, %s12
  $region1: #{_dqn_forward.1} parent=0
    #allocation2 [shape = 'u8[131072]{0}', space=vmem, size = 0x20000, scoped, tag = 'input window, operand 3, single buffered']
    #allocation3 [shape = 's32[2]{0}', space=sflag, size = 0x8, scoped, tag = 'scoped memory for _dqn_forward.1']
    #allocation4 [shape = 'u8[131072]{0}', space=vmem, size = 0x20000, scoped, tag = 'input window, operand 5, single buffered']
    #allocation5 [shape = 's32[1]{0}', space=sflag, size = 0x4, scoped, tag = 'scoped memory for _dqn_forward.1']
    #allocation6 [shape = 'u8[131072]{0}', space=vmem, size = 0x20000, scoped, tag = 'input window, operand 7, single buffered']
    #allocation7 [shape = 'u8[65536]{0}', space=vmem, size = 0x10000, scoped, tag = 'input window, operand 9, single buffered']
    #allocation8 [shape = 's32[1]{0}', space=sflag, size = 0x4, scoped, tag = 'scoped memory for _dqn_forward.1']
    %16 = vsyncpa [#allocation3], 0
    %17 = vsyncpa [#allocation5], 0
    %18 = vsyncpa [#allocation8], 0
    loop: start=0, step=1, limit=4
    $region2: #{_dqn_forward.1} parent=1 // loop_pre_header
      _
    $region3: #{_dqn_forward.1} parent=1 // loop_header
      %s20 = sphi 0, %s24
      %p21 = scmp.ge.s32.totalorder %s20, 4
      %s30 = sphi 0, %s32
      %s33 = sphi 0, %s30
      %s34 = sphi 0, %s33
      %s50 = sphi 0, %s34
      %s54 = sphi 0, %s54
      %s56 = sphi 0, %s54
      %s57 = sphi 0, %s56
      %s71 = sphi 0, %s57
      %s75 = sphi 0, %s75
      %s77 = sphi 0, %s75
      %s78 = sphi 0, %s77
      %s92 = sphi 0, %s78
      %s96 = sphi 0, %s96
      %s98 = sphi 0, %s96
      %s99 = sphi 0, %s98
      %s113 = sphi 0, %s99
      %s117 = sphi 0, %s117
      %s119 = sphi 0, %s117
      %s120 = sphi 0, %s119
      %s134 = sphi 0, %s120
      %s138 = sphi 0, %s138
      %s140 = sphi 0, %s138
      %s141 = sphi 0, %s140
      %s155 = sphi 0, %s141
      %s159 = sphi 0, %s159
      %s161 = sphi 0, %s159
      %s162 = sphi 0, %s161
      %s176 = sphi 0, %s162
      %s180 = sphi 0, %s180
      %s182 = sphi 0, %s180
      %s183 = sphi 0, %s182
      %s197 = sphi 0, %s183
      %s201 = sphi 0, %s201
      %s203 = sphi 0, %s201
      %s204 = sphi 0, %s203
      %s218 = sphi 0, %s204
      %s222 = sphi 0, %s222
      %s224 = sphi 0, %s222
      %s225 = sphi 0, %s224
      %s239 = sphi 0, %s225
      %s243 = sphi 0, %s243
      %s245 = sphi 0, %s243
      %s246 = sphi 0, %s245
      %s260 = sphi 0, %s246
      %s266 = sphi 0, %s268
      %s269 = sphi 0, %s266
      %s270 = sphi 0, %s269
      %s286 = sphi 0, %s270
    $region4: #{_dqn_forward.1} parent=1 // loop_header_branch
      %23 = sbr.rel (%p21) target = $region8
    $region5: #{_dqn_forward.1} parent=1 // loop_body
      %s25 = ssub.s32 %s20, 1
      %s26 = ssub.s32 %s20, 2
      %s27 = sadd.s32 %s20, 1
      %s28 = ssub.s32 %s20, %s27
      %p29 = scmp.eq.s32.totalorder %s28, 0
      %s31 = sadd.s32 %s30, 1
      %s32 = scalar_select %p29, %s30, %s31
      %p35 = pneg %p29
      %p36 = scmp.eq.s32.totalorder %s20, 1
      %p37 = por %p35, %p36
      %p38 = scmp.ne.s32.totalorder %s30, %s33
      %p39 = scmp.eq.s32.totalorder %s20, 0
      %p40 = por %p38, %p39
      %p41 = scmp.ne.s32.totalorder %s30, %s33
      %p42 = scmp.eq.s32.totalorder %s25, 1
      %p43 = por %p41, %p42
      %p44 = scmp.ne.s32.totalorder %s33, %s34
      %p45 = scmp.eq.s32.totalorder %s25, 0
      %p46 = por %p44, %p45
      %p47 = scmp.ne.s32.totalorder %s33, %s34
      %p48 = scmp.eq.s32.totalorder %s26, 1
      %p49 = por %p47, %p48
      %p51 = scmp.ne.s32.totalorder %s34, %s50
      %p52 = scmp.eq.s32.totalorder %s26, 0
      %p53 = por %p51, %p52
      %s55 = sadd.s32 %s54, 1
      %p58 = scmp.eq.s32.totalorder %s20, 1
      %p59 = scmp.ne.s32.totalorder %s54, %s56
      %p60 = scmp.eq.s32.totalorder %s20, 0
      %p61 = por %p59, %p60
      %p62 = scmp.ne.s32.totalorder %s54, %s56
      %p63 = scmp.eq.s32.totalorder %s25, 1
      %p64 = por %p62, %p63
      %p65 = scmp.ne.s32.totalorder %s56, %s57
      %p66 = scmp.eq.s32.totalorder %s25, 0
      %p67 = por %p65, %p66
      %p68 = scmp.ne.s32.totalorder %s56, %s57
      %p69 = scmp.eq.s32.totalorder %s26, 1
      %p70 = por %p68, %p69
      %p72 = scmp.ne.s32.totalorder %s57, %s71
      %p73 = scmp.eq.s32.totalorder %s26, 0
      %p74 = por %p72, %p73
      %s76 = sadd.s32 %s75, 1
      %p79 = scmp.eq.s32.totalorder %s20, 1
      %p80 = scmp.ne.s32.totalorder %s75, %s77
      %p81 = scmp.eq.s32.totalorder %s20, 0
      %p82 = por %p80, %p81
      %p83 = scmp.ne.s32.totalorder %s75, %s77
      %p84 = scmp.eq.s32.totalorder %s25, 1
      %p85 = por %p83, %p84
      %p86 = scmp.ne.s32.totalorder %s77, %s78
      %p87 = scmp.eq.s32.totalorder %s25, 0
      %p88 = por %p86, %p87
      %p89 = scmp.ne.s32.totalorder %s77, %s78
      %p90 = scmp.eq.s32.totalorder %s26, 1
      %p91 = por %p89, %p90
      %p93 = scmp.ne.s32.totalorder %s78, %s92
      %p94 = scmp.eq.s32.totalorder %s26, 0
      %p95 = por %p93, %p94
      %s97 = sadd.s32 %s96, 1
      %p100 = scmp.eq.s32.totalorder %s20, 1
      %p101 = scmp.ne.s32.totalorder %s96, %s98
      %p102 = scmp.eq.s32.totalorder %s20, 0
      %p103 = por %p101, %p102
      %p104 = scmp.ne.s32.totalorder %s96, %s98
      %p105 = scmp.eq.s32.totalorder %s25, 1
      %p106 = por %p104, %p105
      %p107 = scmp.ne.s32.totalorder %s98, %s99
      %p108 = scmp.eq.s32.totalorder %s25, 0
      %p109 = por %p107, %p108
      %p110 = scmp.ne.s32.totalorder %s98, %s99
      %p111 = scmp.eq.s32.totalorder %s26, 1
      %p112 = por %p110, %p111
      %p114 = scmp.ne.s32.totalorder %s99, %s113
      %p115 = scmp.eq.s32.totalorder %s26, 0
      %p116 = por %p114, %p115
      %s118 = sadd.s32 %s117, 1
      %p121 = scmp.eq.s32.totalorder %s20, 1
      %p122 = scmp.ne.s32.totalorder %s117, %s119
      %p123 = scmp.eq.s32.totalorder %s20, 0
      %p124 = por %p122, %p123
      %p125 = scmp.ne.s32.totalorder %s117, %s119
      %p126 = scmp.eq.s32.totalorder %s25, 1
      %p127 = por %p125, %p126
      %p128 = scmp.ne.s32.totalorder %s119, %s120
      %p129 = scmp.eq.s32.totalorder %s25, 0
      %p130 = por %p128, %p129
      %p131 = scmp.ne.s32.totalorder %s119, %s120
      %p132 = scmp.eq.s32.totalorder %s26, 1
      %p133 = por %p131, %p132
      %p135 = scmp.ne.s32.totalorder %s120, %s134
      %p136 = scmp.eq.s32.totalorder %s26, 0
      %p137 = por %p135, %p136
      %s139 = sadd.s32 %s138, 1
      %p142 = scmp.eq.s32.totalorder %s20, 1
      %p143 = scmp.ne.s32.totalorder %s138, %s140
      %p144 = scmp.eq.s32.totalorder %s20, 0
      %p145 = por %p143, %p144
      %p146 = scmp.ne.s32.totalorder %s138, %s140
      %p147 = scmp.eq.s32.totalorder %s25, 1
      %p148 = por %p146, %p147
      %p149 = scmp.ne.s32.totalorder %s140, %s141
      %p150 = scmp.eq.s32.totalorder %s25, 0
      %p151 = por %p149, %p150
      %p152 = scmp.ne.s32.totalorder %s140, %s141
      %p153 = scmp.eq.s32.totalorder %s26, 1
      %p154 = por %p152, %p153
      %p156 = scmp.ne.s32.totalorder %s141, %s155
      %p157 = scmp.eq.s32.totalorder %s26, 0
      %p158 = por %p156, %p157
      %s160 = sadd.s32 %s159, 1
      %p163 = scmp.eq.s32.totalorder %s20, 1
      %p164 = scmp.ne.s32.totalorder %s159, %s161
      %p165 = scmp.eq.s32.totalorder %s20, 0
      %p166 = por %p164, %p165
      %p167 = scmp.ne.s32.totalorder %s159, %s161
      %p168 = scmp.eq.s32.totalorder %s25, 1
      %p169 = por %p167, %p168
      %p170 = scmp.ne.s32.totalorder %s161, %s162
      %p171 = scmp.eq.s32.totalorder %s25, 0
      %p172 = por %p170, %p171
      %p173 = scmp.ne.s32.totalorder %s161, %s162
      %p174 = scmp.eq.s32.totalorder %s26, 1
      %p175 = por %p173, %p174
      %p177 = scmp.ne.s32.totalorder %s162, %s176
      %p178 = scmp.eq.s32.totalorder %s26, 0
      %p179 = por %p177, %p178
      %s181 = sadd.s32 %s180, 1
      %p184 = scmp.eq.s32.totalorder %s20, 1
      %p185 = scmp.ne.s32.totalorder %s180, %s182
      %p186 = scmp.eq.s32.totalorder %s20, 0
      %p187 = por %p185, %p186
      %p188 = scmp.ne.s32.totalorder %s180, %s182
      %p189 = scmp.eq.s32.totalorder %s25, 1
      %p190 = por %p188, %p189
      %p191 = scmp.ne.s32.totalorder %s182, %s183
      %p192 = scmp.eq.s32.totalorder %s25, 0
      %p193 = por %p191, %p192
      %p194 = scmp.ne.s32.totalorder %s182, %s183
      %p195 = scmp.eq.s32.totalorder %s26, 1
      %p196 = por %p194, %p195
      %p198 = scmp.ne.s32.totalorder %s183, %s197
      %p199 = scmp.eq.s32.totalorder %s26, 0
      %p200 = por %p198, %p199
      %s202 = sadd.s32 %s201, 1
      %p205 = scmp.eq.s32.totalorder %s20, 1
      %p206 = scmp.ne.s32.totalorder %s201, %s203
      %p207 = scmp.eq.s32.totalorder %s20, 0
      %p208 = por %p206, %p207
      %p209 = scmp.ne.s32.totalorder %s201, %s203
      %p210 = scmp.eq.s32.totalorder %s25, 1
      %p211 = por %p209, %p210
      %p212 = scmp.ne.s32.totalorder %s203, %s204
      %p213 = scmp.eq.s32.totalorder %s25, 0
      %p214 = por %p212, %p213
      %p215 = scmp.ne.s32.totalorder %s203, %s204
      %p216 = scmp.eq.s32.totalorder %s26, 1
      %p217 = por %p215, %p216
      %p219 = scmp.ne.s32.totalorder %s204, %s218
      %p220 = scmp.eq.s32.totalorder %s26, 0
      %p221 = por %p219, %p220
      %s223 = sadd.s32 %s222, 1
      %p226 = scmp.eq.s32.totalorder %s20, 1
      %p227 = scmp.ne.s32.totalorder %s222, %s224
      %p228 = scmp.eq.s32.totalorder %s20, 0
      %p229 = por %p227, %p228
      %p230 = scmp.ne.s32.totalorder %s222, %s224
      %p231 = scmp.eq.s32.totalorder %s25, 1
      %p232 = por %p230, %p231
      %p233 = scmp.ne.s32.totalorder %s224, %s225
      %p234 = scmp.eq.s32.totalorder %s25, 0
      %p235 = por %p233, %p234
      %p236 = scmp.ne.s32.totalorder %s224, %s225
      %p237 = scmp.eq.s32.totalorder %s26, 1
      %p238 = por %p236, %p237
      %p240 = scmp.ne.s32.totalorder %s225, %s239
      %p241 = scmp.eq.s32.totalorder %s26, 0
      %p242 = por %p240, %p241
      %s244 = sadd.s32 %s243, 1
      %p247 = scmp.eq.s32.totalorder %s20, 1
      %p248 = scmp.ne.s32.totalorder %s243, %s245
      %p249 = scmp.eq.s32.totalorder %s20, 0
      %p250 = por %p248, %p249
      %p251 = scmp.ne.s32.totalorder %s243, %s245
      %p252 = scmp.eq.s32.totalorder %s25, 1
      %p253 = por %p251, %p252
      %p254 = scmp.ne.s32.totalorder %s245, %s246
      %p255 = scmp.eq.s32.totalorder %s25, 0
      %p256 = por %p254, %p255
      %p257 = scmp.ne.s32.totalorder %s245, %s246
      %p258 = scmp.eq.s32.totalorder %s26, 1
      %p259 = por %p257, %p258
      %p261 = scmp.ne.s32.totalorder %s246, %s260
      %p262 = scmp.eq.s32.totalorder %s26, 0
      %p263 = por %p261, %p262
      %s264 = ssub.s32 %s20, %s27
      %p265 = scmp.eq.s32.totalorder %s264, 0
      %s267 = sadd.s32 %s266, 1
      %s268 = scalar_select %p265, %s266, %s267
      %p271 = pneg %p265
      %p272 = scmp.eq.s32.totalorder %s20, 1
      %p273 = por %p271, %p272
      %p274 = scmp.ne.s32.totalorder %s266, %s269
      %p275 = scmp.eq.s32.totalorder %s20, 0
      %p276 = por %p274, %p275
      %p277 = scmp.ne.s32.totalorder %s266, %s269
      %p278 = scmp.eq.s32.totalorder %s25, 1
      %p279 = por %p277, %p278
      %p280 = scmp.ne.s32.totalorder %s269, %s270
      %p281 = scmp.eq.s32.totalorder %s25, 0
      %p282 = por %p280, %p281
      %p283 = scmp.ne.s32.totalorder %s269, %s270
      %p284 = scmp.eq.s32.totalorder %s26, 1
      %p285 = por %p283, %p284
      %p287 = scmp.ne.s32.totalorder %s270, %s286
      %p288 = scmp.eq.s32.totalorder %s26, 0
      %p289 = por %p287, %p288
      %p290 = scmp.le.s32.totalorder 1, %s20
      %p291 = scmp.lt.s32.totalorder %s20, 3
      %p292 = pnand %p290, %p291
      %p293 = pneg %p292
      // Predicated region
      $region9: #{_dqn_forward.1} parent=5 // pred_check
        _
      $region10: #{_dqn_forward.1} parent=5 // pred_check_branch
        %295 = sbr.rel (%p292) target = $region12
      $region11: #{_dqn_forward.1} parent=5 // pred_region
        %s296 = ssub.s32 %s20, 1
        // Predicated region
        $region13: #{_dqn_forward.1} parent=11 // pred_check
          %p297 = pneg %p67
        $region14: #{_dqn_forward.1} parent=11 // pred_check_branch
          %299 = sbr.rel (%p297) target = $region16
        $region15: #{_dqn_forward.1} parent=11 // pred_region
          _
        $region16: #{_dqn_forward.1} parent=11 // pred_fallthru
          _
        // Predicated region
        $region17: #{_dqn_forward.1} parent=11 // pred_check
          %p300 = pneg %p88
        $region18: #{_dqn_forward.1} parent=11 // pred_check_branch
          %302 = sbr.rel (%p300) target = $region20
        $region19: #{_dqn_forward.1} parent=11 // pred_region
          _
        $region20: #{_dqn_forward.1} parent=11 // pred_fallthru
          _
        // Predicated region
        $region21: #{_dqn_forward.1} parent=11 // pred_check
          %p303 = pneg %p109
        $region22: #{_dqn_forward.1} parent=11 // pred_check_branch
          %305 = sbr.rel (%p303) target = $region24
        $region23: #{_dqn_forward.1} parent=11 // pred_region
          %s307 = ssub.s32 4096, 4096
          %308 = vsyncadd [#allocation3], %s307
          %s309 = sshll.u32 [#allocation2], 4
          %s310 = int_to_ptr.vmem [resolvable:$true] %s309
          %315 = dma.hbm_to_vmem [thread:$0]  %s3, 4096, %s310, [#allocation3], 128, 128, 8
        $region24: #{_dqn_forward.1} parent=11 // pred_fallthru
          _
        // Predicated region
        $region25: #{_dqn_forward.1} parent=11 // pred_check
          %p316 = pneg %p130
        $region26: #{_dqn_forward.1} parent=11 // pred_check_branch
          %318 = sbr.rel (%p316) target = $region28
        $region27: #{_dqn_forward.1} parent=11 // pred_region
          _
        $region28: #{_dqn_forward.1} parent=11 // pred_fallthru
          _
        // Predicated region
        $region29: #{_dqn_forward.1} parent=11 // pred_check
          %p319 = pneg %p151
        $region30: #{_dqn_forward.1} parent=11 // pred_check_branch
          %321 = sbr.rel (%p319) target = $region32
        $region31: #{_dqn_forward.1} parent=11 // pred_region
          %s323 = ssub.s32 4096, 4096
          %324 = vsyncadd [#allocation5], %s323
          %s325 = sshll.u32 [#allocation4], 4
          %s326 = int_to_ptr.vmem [resolvable:$true] %s325
          %331 = dma.hbm_to_vmem [thread:$0]  %s5, 4096, %s326, [#allocation5], 128, 128, 8
        $region32: #{_dqn_forward.1} parent=11 // pred_fallthru
          _
        // Predicated region
        $region33: #{_dqn_forward.1} parent=11 // pred_check
          %p332 = pneg %p172
        $region34: #{_dqn_forward.1} parent=11 // pred_check_branch
          %334 = sbr.rel (%p332) target = $region36
        $region35: #{_dqn_forward.1} parent=11 // pred_region
          _
        $region36: #{_dqn_forward.1} parent=11 // pred_fallthru
          _
        // Predicated region
        $region37: #{_dqn_forward.1} parent=11 // pred_check
          %p335 = pneg %p193
        $region38: #{_dqn_forward.1} parent=11 // pred_check_branch
          %337 = sbr.rel (%p335) target = $region40
        $region39: #{_dqn_forward.1} parent=11 // pred_region
          %s339 = ssub.s32 4096, 4096
          %340 = vsyncadd [#allocation5], %s339
          %s341 = sshll.u32 [#allocation6], 4
          %s342 = int_to_ptr.vmem [resolvable:$true] %s341
          %347 = dma.hbm_to_vmem [thread:$0]  %s7, 4096, %s342, [#allocation5], 128, 128, 8
        $region40: #{_dqn_forward.1} parent=11 // pred_fallthru
          _
        // Predicated region
        $region41: #{_dqn_forward.1} parent=11 // pred_check
          %p348 = pneg %p214
        $region42: #{_dqn_forward.1} parent=11 // pred_check_branch
          %350 = sbr.rel (%p348) target = $region44
        $region43: #{_dqn_forward.1} parent=11 // pred_region
          _
        $region44: #{_dqn_forward.1} parent=11 // pred_fallthru
          _
        // Predicated region
        $region45: #{_dqn_forward.1} parent=11 // pred_check
          %p351 = pneg %p235
        $region46: #{_dqn_forward.1} parent=11 // pred_check_branch
          %353 = sbr.rel (%p351) target = $region48
        $region47: #{_dqn_forward.1} parent=11 // pred_region
          %s355 = ssub.s32 2048, 2048
          %356 = vsyncadd [#allocation8], %s355
          %s357 = sshll.u32 [#allocation7], 4
          %s358 = int_to_ptr.vmem [resolvable:$true] %s357
          %363 = dma.hbm_to_vmem [thread:$0]  %s9, 2048, %s358, [#allocation8], 64, 64, 4
        $region48: #{_dqn_forward.1} parent=11 // pred_fallthru
          _
        // Predicated region
        $region49: #{_dqn_forward.1} parent=11 // pred_check
          %p364 = pneg %p256
        $region50: #{_dqn_forward.1} parent=11 // pred_check_branch
          %366 = sbr.rel (%p364) target = $region52
        $region51: #{_dqn_forward.1} parent=11 // pred_region
          _
        $region52: #{_dqn_forward.1} parent=11 // pred_fallthru
          _
      $region12: #{_dqn_forward.1} parent=5 // pred_fallthru
        _
      %p367 = scmp.lt.s32.totalorder %s20, 2
      // Predicated region
      $region53: #{_dqn_forward.1} parent=5 // pred_check
        %p368 = pneg %p367
      $region54: #{_dqn_forward.1} parent=5 // pred_check_branch
        %370 = sbr.rel (%p368) target = $region56
      $region55: #{_dqn_forward.1} parent=5 // pred_region
        // Predicated region
        $region57: #{_dqn_forward.1} parent=55 // pred_check
          %p371 = pneg %p40
        $region58: #{_dqn_forward.1} parent=55 // pred_check_branch
          %373 = sbr.rel (%p371) target = $region60
        $region59: #{_dqn_forward.1} parent=55 // pred_region
          %p374 = scmp.lt.s32.totalorder %s20, 1
          %s375 = scalar_select %p374, %s20, 1
          %s376 = smul.addr %s375, 8
          %s377 = scalar_lea.vmem %s0, %s376
        $region60: #{_dqn_forward.1} parent=55 // pred_fallthru
          _
      $region56: #{_dqn_forward.1} parent=5 // pred_fallthru
        _
      %p378 = scmp.le.s32.totalorder 1, %s20
      %p379 = scmp.lt.s32.totalorder %s20, 3
      %p380 = pnand %p378, %p379
      %p381 = pneg %p380
      // Predicated region
      $region61: #{_dqn_forward.1} parent=5 // pred_check
        _
      $region62: #{_dqn_forward.1} parent=5 // pred_check_branch
        %383 = sbr.rel (%p380) target = $region64
      $region63: #{_dqn_forward.1} parent=5 // pred_region
        %s384 = ssub.s32 %s20, 1
        // Predicated region
        $region65: #{_dqn_forward.1} parent=63 // pred_check
          %p385 = pneg %p109
        $region66: #{_dqn_forward.1} parent=63 // pred_check_branch
          %387 = sbr.rel (%p385) target = $region68
        $region67: #{_dqn_forward.1} parent=63 // pred_region
          %388 = dma.done [#allocation3], 4096
        $region68: #{_dqn_forward.1} parent=63 // pred_fallthru
          _
        // Predicated region
        $region69: #{_dqn_forward.1} parent=63 // pred_check
          %p389 = pneg %p151
        $region70: #{_dqn_forward.1} parent=63 // pred_check_branch
          %391 = sbr.rel (%p389) target = $region72
        $region71: #{_dqn_forward.1} parent=63 // pred_region
          %392 = dma.done [#allocation5], 4096
        $region72: #{_dqn_forward.1} parent=63 // pred_fallthru
          _
        // Predicated region
        $region73: #{_dqn_forward.1} parent=63 // pred_check
          %p393 = pneg %p193
        $region74: #{_dqn_forward.1} parent=63 // pred_check_branch
          %395 = sbr.rel (%p393) target = $region76
        $region75: #{_dqn_forward.1} parent=63 // pred_region
          %396 = dma.done [#allocation5], 4096
        $region76: #{_dqn_forward.1} parent=63 // pred_fallthru
          _
        // Predicated region
        $region77: #{_dqn_forward.1} parent=63 // pred_check
          %p397 = pneg %p235
        $region78: #{_dqn_forward.1} parent=63 // pred_check_branch
          %399 = sbr.rel (%p397) target = $region80
        $region79: #{_dqn_forward.1} parent=63 // pred_region
          %400 = dma.done [#allocation8], 2048
        $region80: #{_dqn_forward.1} parent=63 // pred_fallthru
          _
        %p401 = scmp.lt.s32.totalorder %s25, 1
        %s402 = scalar_select %p401, %s25, 1
        %s403 = smul.addr %s402, 8
        %s404 = scalar_lea.vmem %s0, %s403
        %p405 = pneg %p46
        %p406 = pneg %p43
        %p407 = pneg %p67
        %p408 = pneg %p64
        %p409 = pneg %p88
        %p410 = pneg %p85
        %p411 = pneg %p109
        %p412 = pneg %p106
        %p413 = pneg %p130
        %p414 = pneg %p127
        %p415 = pneg %p151
        %p416 = pneg %p148
        %p417 = pneg %p172
        %p418 = pneg %p169
        %p419 = pneg %p193
        %p420 = pneg %p190
        %p421 = pneg %p214
        %p422 = pneg %p211
        %p423 = pneg %p235
        %p424 = pneg %p232
        %p425 = pneg %p256
        %p426 = pneg %p253
        %p427 = pneg %p282
        %p428 = pneg %p279
        %p429 = scmp.lt.s32.totalorder %s25, 1
        %s430 = scalar_select %p429, %s25, 1
        %s431 = smul.addr %s430, 8
        %s432 = scalar_lea.vmem %s11, %s431
        %p433 = scmp.lt.s32.totalorder %s25, 1
        %s434 = scalar_select %p433, %s25, 1
        %s435 = smul.addr %s434, 8
        %s436 = scalar_lea.vmem %s0, %s435
        %p437 = scmp.lt.s32.totalorder %s25, 1
        %s438 = scalar_select %p437, %s25, 1
        %s439 = smul.addr %s438, 8
        %s440 = scalar_lea.vmem %s11, %s439
        %v442 = vld [vmem:[%s436] sm:$0xff]
        %v443 = vpack.c.bf16 %v442, %v442
        %v444 = vld [vmem:[%s1] sm:$0xff]
        %v445 = vld [vmem:[%s2] sm:$0x3]
        %v447 = vlaneseq
        %v448 = vshrl.u32 %v447, 7
        %v449 = vsub.s32 0, %v448
        %v450 = vrot.slane %v445, %v449
        %v451 = vlaneseq
        %v452 = vshrl.u32 %v451, 7
        %v453 = vsub.s32 1, %v452
        %v454 = vrot.slane %v445, %v453
        %v458 = vunpack.c.l.b16 %v444
        %v459 = vunpack.c.h.b16 %v444
        %v460 = vpack.c.b16 %v458, %v458
        %v461 = vpack.c.b16 %v459, %v459
        %vm462 = vcmask 64512
        %v464 = vsel %vm462, %v443, 0
        %vm466 = vcmask 1043456
        %v468 = vsel %vm466, %v460, 0
        %v471 = vsel %vm466, %v461, 0
        %473 = vmatprep.subr.bf16.mxu0 %v471
        %474 = vmatpush1.bf16.msra.mxu0 %v468
        %475 = vmatprep.subr.bf16.mxu0 0
        %476 = vmatpush1.bf16.msra.mxu0 0
        %477 = vmatprep.subr.bf16.mxu0 0
        %478 = vmatpush1.bf16.msra.mxu0 0
        %479 = vmatprep.subr.bf16.mxu0 0
        %480 = vmatpush1.bf16.msra.mxu0 0
        %481 = vmatprep.subr.bf16.mxu0 0
        %482 = vmatpush1.bf16.msra.mxu0 0
        %483 = vmatprep.subr.bf16.mxu0 0
        %484 = vmatpush1.bf16.msra.mxu0 0
        %485 = vmatprep.subr.bf16.mxu0 0
        %486 = vmatpush1.bf16.msra.mxu0 0
        %487 = vmatprep.subr.bf16.mxu0 0
        %488 = vmatpush1.bf16.msra.mxu0 0
        %489 = vmatprep.subr.bf16.mxu0 0
        %490 = vmatpush1.bf16.msra.mxu0 0
        %491 = vmatprep.subr.bf16.mxu0 0
        %492 = vmatpush1.bf16.msra.mxu0 0
        %493 = vmatprep.subr.bf16.mxu0 0
        %494 = vmatpush1.bf16.msra.mxu0 0
        %495 = vmatprep.subr.bf16.mxu0 0
        %496 = vmatpush1.bf16.msra.mxu0 0
        %497 = vmatprep.subr.bf16.mxu0 0
        %498 = vmatpush1.bf16.msra.mxu0 0
        %499 = vmatprep.subr.bf16.mxu0 0
        %500 = vmatpush1.bf16.msra.mxu0 0
        %501 = vmatprep.subr.bf16.mxu0 0
        %502 = vmatpush1.bf16.msra.mxu0 0
        %503 = vmatprep.subr.bf16.mxu0 0
        %504 = vmatpush1.bf16.msra.mxu0 0
        %505 = vmatprep.mubr.bf16.mxu0 0
        %506 = vmatmul.mubr.bf16.gmra.mrb[0].mxu0 %v464
        %v507 = vpop.f32.mrb[0].mxu0
        %v508 = vadd.f32 %v450, %v507
        %v509 = vpop.f32.mrb[0].mxu0
        %v510 = vadd.f32 %v454, %v509
        %v511 = vpop.f32.mrb[0].mxu0
        %v512 = vpop.f32.mrb[0].mxu0
        %513 = vdwg.mxu0
        %v514 = vmax.f32 %v508, 0.0
        %v515 = vmax.f32 %v510, 0.0
        %v516 = vpack.c.bf16 %v514, %v514
        %v517 = vpack.c.bf16 %v515, %v515
        %v518 = vld [vmem:[#allocation2] sm:$0xff]
        %v519 = vld [vmem:[#allocation2 + $0x8] sm:$0xff]
        %v520 = vld [vmem:[#allocation2 + $0x10] sm:$0xff]
        %v521 = vld [vmem:[#allocation2 + $0x18] sm:$0xff]
        %v522 = vld [vmem:[#allocation2 + $0x20] sm:$0xff]
        %v523 = vld [vmem:[#allocation2 + $0x28] sm:$0xff]
        %v524 = vld [vmem:[#allocation2 + $0x30] sm:$0xff]
        %v525 = vld [vmem:[#allocation2 + $0x38] sm:$0xff]
        %v526 = vld [vmem:[#allocation2 + $0x40] sm:$0xff]
        %v527 = vld [vmem:[#allocation2 + $0x48] sm:$0xff]
        %v528 = vld [vmem:[#allocation2 + $0x50] sm:$0xff]
        %v529 = vld [vmem:[#allocation2 + $0x58] sm:$0xff]
        %v530 = vld [vmem:[#allocation2 + $0x60] sm:$0xff]
        %v531 = vld [vmem:[#allocation2 + $0x68] sm:$0xff]
        %v532 = vld [vmem:[#allocation2 + $0x70] sm:$0xff]
        %v533 = vld [vmem:[#allocation2 + $0x78] sm:$0xff]
        %v534 = vld [vmem:[#allocation2 + $0x80] sm:$0xff]
        %v535 = vld [vmem:[#allocation2 + $0x88] sm:$0xff]
        %v536 = vld [vmem:[#allocation2 + $0x90] sm:$0xff]
        %v537 = vld [vmem:[#allocation2 + $0x98] sm:$0xff]
        %v538 = vld [vmem:[#allocation2 + $0xa0] sm:$0xff]
        %v539 = vld [vmem:[#allocation2 + $0xa8] sm:$0xff]
        %v540 = vld [vmem:[#allocation2 + $0xb0] sm:$0xff]
        %v541 = vld [vmem:[#allocation2 + $0xb8] sm:$0xff]
        %v542 = vld [vmem:[#allocation2 + $0xc0] sm:$0xff]
        %v543 = vld [vmem:[#allocation2 + $0xc8] sm:$0xff]
        %v544 = vld [vmem:[#allocation2 + $0xd0] sm:$0xff]
        %v545 = vld [vmem:[#allocation2 + $0xd8] sm:$0xff]
        %v546 = vld [vmem:[#allocation2 + $0xe0] sm:$0xff]
        %v547 = vld [vmem:[#allocation2 + $0xe8] sm:$0xff]
        %v548 = vld [vmem:[#allocation2 + $0xf0] sm:$0xff]
        %v549 = vld [vmem:[#allocation2 + $0xf8] sm:$0xff]
        %v550 = vld [vmem:[%s4] sm:$0x3]
        %v552 = vlaneseq
        %v553 = vshrl.u32 %v552, 7
        %v554 = vsub.s32 0, %v553
        %v555 = vrot.slane %v550, %v554
        %v556 = vlaneseq
        %v557 = vshrl.u32 %v556, 7
        %v558 = vsub.s32 1, %v557
        %v559 = vrot.slane %v550, %v558
        %v594 = vunpack.c.l.b16 %v518
        %v595 = vunpack.c.h.b16 %v518
        %v596 = vunpack.c.l.b16 %v519
        %v597 = vunpack.c.h.b16 %v519
        %v598 = vunpack.c.l.b16 %v520
        %v599 = vunpack.c.h.b16 %v520
        %v600 = vunpack.c.l.b16 %v521
        %v601 = vunpack.c.h.b16 %v521
        %v602 = vunpack.c.l.b16 %v522
        %v603 = vunpack.c.h.b16 %v522
        %v604 = vunpack.c.l.b16 %v523
        %v605 = vunpack.c.h.b16 %v523
        %v606 = vunpack.c.l.b16 %v524
        %v607 = vunpack.c.h.b16 %v524
        %v608 = vunpack.c.l.b16 %v525
        %v609 = vunpack.c.h.b16 %v525
        %v610 = vunpack.c.l.b16 %v526
        %v611 = vunpack.c.h.b16 %v526
        %v612 = vunpack.c.l.b16 %v527
        %v613 = vunpack.c.h.b16 %v527
        %v614 = vunpack.c.l.b16 %v528
        %v615 = vunpack.c.h.b16 %v528
        %v616 = vunpack.c.l.b16 %v529
        %v617 = vunpack.c.h.b16 %v529
        %v618 = vunpack.c.l.b16 %v530
        %v619 = vunpack.c.h.b16 %v530
        %v620 = vunpack.c.l.b16 %v531
        %v621 = vunpack.c.h.b16 %v531
        %v622 = vunpack.c.l.b16 %v532
        %v623 = vunpack.c.h.b16 %v532
        %v624 = vunpack.c.l.b16 %v533
        %v625 = vunpack.c.h.b16 %v533
        %v626 = vunpack.c.l.b16 %v534
        %v627 = vunpack.c.h.b16 %v534
        %v628 = vunpack.c.l.b16 %v535
        %v629 = vunpack.c.h.b16 %v535
        %v630 = vunpack.c.l.b16 %v536
        %v631 = vunpack.c.h.b16 %v536
        %v632 = vunpack.c.l.b16 %v537
        %v633 = vunpack.c.h.b16 %v537
        %v634 = vunpack.c.l.b16 %v538
        %v635 = vunpack.c.h.b16 %v538
        %v636 = vunpack.c.l.b16 %v539
        %v637 = vunpack.c.h.b16 %v539
        %v638 = vunpack.c.l.b16 %v540
        %v639 = vunpack.c.h.b16 %v540
        %v640 = vunpack.c.l.b16 %v541
        %v641 = vunpack.c.h.b16 %v541
        %v642 = vunpack.c.l.b16 %v542
        %v643 = vunpack.c.h.b16 %v542
        %v644 = vunpack.c.l.b16 %v543
        %v645 = vunpack.c.h.b16 %v543
        %v646 = vunpack.c.l.b16 %v544
        %v647 = vunpack.c.h.b16 %v544
        %v648 = vunpack.c.l.b16 %v545
        %v649 = vunpack.c.h.b16 %v545
        %v650 = vunpack.c.l.b16 %v546
        %v651 = vunpack.c.h.b16 %v546
        %v652 = vunpack.c.l.b16 %v547
        %v653 = vunpack.c.h.b16 %v547
        %v654 = vunpack.c.l.b16 %v548
        %v655 = vunpack.c.h.b16 %v548
        %v656 = vunpack.c.l.b16 %v549
        %v657 = vunpack.c.h.b16 %v549
        %v658 = vpack.c.b16 %v596, %v594
        %v659 = vpack.c.b16 %v597, %v595
        %v660 = vpack.c.b16 %v600, %v598
        %v661 = vpack.c.b16 %v601, %v599
        %v662 = vpack.c.b16 %v604, %v602
        %v663 = vpack.c.b16 %v605, %v603
        %v664 = vpack.c.b16 %v608, %v606
        %v665 = vpack.c.b16 %v609, %v607
        %v666 = vpack.c.b16 %v612, %v610
        %v667 = vpack.c.b16 %v613, %v611
        %v668 = vpack.c.b16 %v616, %v614
        %v669 = vpack.c.b16 %v617, %v615
        %v670 = vpack.c.b16 %v620, %v618
        %v671 = vpack.c.b16 %v621, %v619
        %v672 = vpack.c.b16 %v624, %v622
        %v673 = vpack.c.b16 %v625, %v623
        %v674 = vpack.c.b16 %v628, %v626
        %v675 = vpack.c.b16 %v629, %v627
        %v676 = vpack.c.b16 %v632, %v630
        %v677 = vpack.c.b16 %v633, %v631
        %v678 = vpack.c.b16 %v636, %v634
        %v679 = vpack.c.b16 %v637, %v635
        %v680 = vpack.c.b16 %v640, %v638
        %v681 = vpack.c.b16 %v641, %v639
        %v682 = vpack.c.b16 %v644, %v642
        %v683 = vpack.c.b16 %v645, %v643
        %v684 = vpack.c.b16 %v648, %v646
        %v685 = vpack.c.b16 %v649, %v647
        %v686 = vpack.c.b16 %v652, %v650
        %v687 = vpack.c.b16 %v653, %v651
        %v688 = vpack.c.b16 %v656, %v654
        %v689 = vpack.c.b16 %v657, %v655
        %722 = vmatprep.subr.bf16.mxu0 %v659
        %723 = vmatpush1.bf16.msra.mxu0 %v658
        %724 = vmatprep.subr.bf16.mxu0 %v661
        %725 = vmatpush1.bf16.msra.mxu0 %v660
        %726 = vmatprep.subr.bf16.mxu0 %v663
        %727 = vmatpush1.bf16.msra.mxu0 %v662
        %728 = vmatprep.subr.bf16.mxu0 %v665
        %729 = vmatpush1.bf16.msra.mxu0 %v664
        %730 = vmatprep.subr.bf16.mxu0 %v667
        %731 = vmatpush1.bf16.msra.mxu0 %v666
        %732 = vmatprep.subr.bf16.mxu0 %v669
        %733 = vmatpush1.bf16.msra.mxu0 %v668
        %734 = vmatprep.subr.bf16.mxu0 %v671
        %735 = vmatpush1.bf16.msra.mxu0 %v670
        %736 = vmatprep.subr.bf16.mxu0 %v673
        %737 = vmatpush1.bf16.msra.mxu0 %v672
        %738 = vmatprep.subr.bf16.mxu0 %v675
        %739 = vmatpush1.bf16.msra.mxu0 %v674
        %740 = vmatprep.subr.bf16.mxu0 %v677
        %741 = vmatpush1.bf16.msra.mxu0 %v676
        %742 = vmatprep.subr.bf16.mxu0 %v679
        %743 = vmatpush1.bf16.msra.mxu0 %v678
        %744 = vmatprep.subr.bf16.mxu0 %v681
        %745 = vmatpush1.bf16.msra.mxu0 %v680
        %746 = vmatprep.subr.bf16.mxu0 %v683
        %747 = vmatpush1.bf16.msra.mxu0 %v682
        %748 = vmatprep.subr.bf16.mxu0 %v685
        %749 = vmatpush1.bf16.msra.mxu0 %v684
        %750 = vmatprep.subr.bf16.mxu0 %v687
        %751 = vmatpush1.bf16.msra.mxu0 %v686
        %752 = vmatprep.subr.bf16.mxu0 %v689
        %753 = vmatpush1.bf16.msra.mxu0 %v688
        %754 = vmatprep.mubr.bf16.mxu0 %v517
        %755 = vmatmul.mubr.bf16.gmra.mrb[0].mxu0 %v516
        %v756 = vpop.f32.mrb[0].mxu0
        %v757 = vadd.f32 %v555, %v756
        %v758 = vpop.f32.mrb[0].mxu0
        %v759 = vadd.f32 %v559, %v758
        %v760 = vpop.f32.mrb[0].mxu0
        %v761 = vpop.f32.mrb[0].mxu0
        %762 = vdwg.mxu0
        %v763 = vmax.f32 %v757, 0.0
        %v764 = vmax.f32 %v759, 0.0
        %v765 = vpack.c.bf16 %v763, %v763
        %v766 = vpack.c.bf16 %v764, %v764
        %v767 = vld [vmem:[#allocation4] sm:$0xff]
        %v768 = vld [vmem:[#allocation4 + $0x8] sm:$0xff]
        %v769 = vld [vmem:[#allocation4 + $0x10] sm:$0xff]
        %v770 = vld [vmem:[#allocation4 + $0x18] sm:$0xff]
        %v771 = vld [vmem:[#allocation4 + $0x20] sm:$0xff]
        %v772 = vld [vmem:[#allocation4 + $0x28] sm:$0xff]
        %v773 = vld [vmem:[#allocation4 + $0x30] sm:$0xff]
        %v774 = vld [vmem:[#allocation4 + $0x38] sm:$0xff]
        %v775 = vld [vmem:[#allocation4 + $0x40] sm:$0xff]
        %v776 = vld [vmem:[#allocation4 + $0x48] sm:$0xff]
        %v777 = vld [vmem:[#allocation4 + $0x50] sm:$0xff]
        %v778 = vld [vmem:[#allocation4 + $0x58] sm:$0xff]
        %v779 = vld [vmem:[#allocation4 + $0x60] sm:$0xff]
        %v780 = vld [vmem:[#allocation4 + $0x68] sm:$0xff]
        %v781 = vld [vmem:[#allocation4 + $0x70] sm:$0xff]
        %v782 = vld [vmem:[#allocation4 + $0x78] sm:$0xff]
        %v783 = vld [vmem:[#allocation4 + $0x80] sm:$0xff]
        %v784 = vld [vmem:[#allocation4 + $0x88] sm:$0xff]
        %v785 = vld [vmem:[#allocation4 + $0x90] sm:$0xff]
        %v786 = vld [vmem:[#allocation4 + $0x98] sm:$0xff]
        %v787 = vld [vmem:[#allocation4 + $0xa0] sm:$0xff]
        %v788 = vld [vmem:[#allocation4 + $0xa8] sm:$0xff]
        %v789 = vld [vmem:[#allocation4 + $0xb0] sm:$0xff]
        %v790 = vld [vmem:[#allocation4 + $0xb8] sm:$0xff]
        %v791 = vld [vmem:[#allocation4 + $0xc0] sm:$0xff]
        %v792 = vld [vmem:[#allocation4 + $0xc8] sm:$0xff]
        %v793 = vld [vmem:[#allocation4 + $0xd0] sm:$0xff]
        %v794 = vld [vmem:[#allocation4 + $0xd8] sm:$0xff]
        %v795 = vld [vmem:[#allocation4 + $0xe0] sm:$0xff]
        %v796 = vld [vmem:[#allocation4 + $0xe8] sm:$0xff]
        %v797 = vld [vmem:[#allocation4 + $0xf0] sm:$0xff]
        %v798 = vld [vmem:[#allocation4 + $0xf8] sm:$0xff]
        %v799 = vld [vmem:[%s6] sm:$0x3]
        %v801 = vlaneseq
        %v802 = vshrl.u32 %v801, 7
        %v803 = vsub.s32 0, %v802
        %v804 = vrot.slane %v799, %v803
        %v805 = vlaneseq
        %v806 = vshrl.u32 %v805, 7
        %v807 = vsub.s32 1, %v806
        %v808 = vrot.slane %v799, %v807
        %v843 = vunpack.c.l.b16 %v767
        %v844 = vunpack.c.h.b16 %v767
        %v845 = vunpack.c.l.b16 %v768
        %v846 = vunpack.c.h.b16 %v768
        %v847 = vunpack.c.l.b16 %v769
        %v848 = vunpack.c.h.b16 %v769
        %v849 = vunpack.c.l.b16 %v770
        %v850 = vunpack.c.h.b16 %v770
        %v851 = vunpack.c.l.b16 %v771
        %v852 = vunpack.c.h.b16 %v771
        %v853 = vunpack.c.l.b16 %v772
        %v854 = vunpack.c.h.b16 %v772
        %v855 = vunpack.c.l.b16 %v773
        %v856 = vunpack.c.h.b16 %v773
        %v857 = vunpack.c.l.b16 %v774
        %v858 = vunpack.c.h.b16 %v774
        %v859 = vunpack.c.l.b16 %v775
        %v860 = vunpack.c.h.b16 %v775
        %v861 = vunpack.c.l.b16 %v776
        %v862 = vunpack.c.h.b16 %v776
        %v863 = vunpack.c.l.b16 %v777
        %v864 = vunpack.c.h.b16 %v777
        %v865 = vunpack.c.l.b16 %v778
        %v866 = vunpack.c.h.b16 %v778
        %v867 = vunpack.c.l.b16 %v779
        %v868 = vunpack.c.h.b16 %v779
        %v869 = vunpack.c.l.b16 %v780
        %v870 = vunpack.c.h.b16 %v780
        %v871 = vunpack.c.l.b16 %v781
        %v872 = vunpack.c.h.b16 %v781
        %v873 = vunpack.c.l.b16 %v782
        %v874 = vunpack.c.h.b16 %v782
        %v875 = vunpack.c.l.b16 %v783
        %v876 = vunpack.c.h.b16 %v783
        %v877 = vunpack.c.l.b16 %v784
        %v878 = vunpack.c.h.b16 %v784
        %v879 = vunpack.c.l.b16 %v785
        %v880 = vunpack.c.h.b16 %v785
        %v881 = vunpack.c.l.b16 %v786
        %v882 = vunpack.c.h.b16 %v786
        %v883 = vunpack.c.l.b16 %v787
        %v884 = vunpack.c.h.b16 %v787
        %v885 = vunpack.c.l.b16 %v788
        %v886 = vunpack.c.h.b16 %v788
        %v887 = vunpack.c.l.b16 %v789
        %v888 = vunpack.c.h.b16 %v789
        %v889 = vunpack.c.l.b16 %v790
        %v890 = vunpack.c.h.b16 %v790
        %v891 = vunpack.c.l.b16 %v791
        %v892 = vunpack.c.h.b16 %v791
        %v893 = vunpack.c.l.b16 %v792
        %v894 = vunpack.c.h.b16 %v792
        %v895 = vunpack.c.l.b16 %v793
        %v896 = vunpack.c.h.b16 %v793
        %v897 = vunpack.c.l.b16 %v794
        %v898 = vunpack.c.h.b16 %v794
        %v899 = vunpack.c.l.b16 %v795
        %v900 = vunpack.c.h.b16 %v795
        %v901 = vunpack.c.l.b16 %v796
        %v902 = vunpack.c.h.b16 %v796
        %v903 = vunpack.c.l.b16 %v797
        %v904 = vunpack.c.h.b16 %v797
        %v905 = vunpack.c.l.b16 %v798
        %v906 = vunpack.c.h.b16 %v798
        %v907 = vpack.c.b16 %v845, %v843
        %v908 = vpack.c.b16 %v846, %v844
        %v909 = vpack.c.b16 %v849, %v847
        %v910 = vpack.c.b16 %v850, %v848
        %v911 = vpack.c.b16 %v853, %v851
        %v912 = vpack.c.b16 %v854, %v852
        %v913 = vpack.c.b16 %v857, %v855
        %v914 = vpack.c.b16 %v858, %v856
        %v915 = vpack.c.b16 %v861, %v859
        %v916 = vpack.c.b16 %v862, %v860
        %v917 = vpack.c.b16 %v865, %v863
        %v918 = vpack.c.b16 %v866, %v864
        %v919 = vpack.c.b16 %v869, %v867
        %v920 = vpack.c.b16 %v870, %v868
        %v921 = vpack.c.b16 %v873, %v871
        %v922 = vpack.c.b16 %v874, %v872
        %v923 = vpack.c.b16 %v877, %v875
        %v924 = vpack.c.b16 %v878, %v876
        %v925 = vpack.c.b16 %v881, %v879
        %v926 = vpack.c.b16 %v882, %v880
        %v927 = vpack.c.b16 %v885, %v883
        %v928 = vpack.c.b16 %v886, %v884
        %v929 = vpack.c.b16 %v889, %v887
        %v930 = vpack.c.b16 %v890, %v888
        %v931 = vpack.c.b16 %v893, %v891
        %v932 = vpack.c.b16 %v894, %v892
        %v933 = vpack.c.b16 %v897, %v895
        %v934 = vpack.c.b16 %v898, %v896
        %v935 = vpack.c.b16 %v901, %v899
        %v936 = vpack.c.b16 %v902, %v900
        %v937 = vpack.c.b16 %v905, %v903
        %v938 = vpack.c.b16 %v906, %v904
        %971 = vmatprep.subr.bf16.mxu0 %v908
        %972 = vmatpush1.bf16.msra.mxu0 %v907
        %973 = vmatprep.subr.bf16.mxu0 %v910
        %974 = vmatpush1.bf16.msra.mxu0 %v909
        %975 = vmatprep.subr.bf16.mxu0 %v912
        %976 = vmatpush1.bf16.msra.mxu0 %v911
        %977 = vmatprep.subr.bf16.mxu0 %v914
        %978 = vmatpush1.bf16.msra.mxu0 %v913
        %979 = vmatprep.subr.bf16.mxu0 %v916
        %980 = vmatpush1.bf16.msra.mxu0 %v915
        %981 = vmatprep.subr.bf16.mxu0 %v918
        %982 = vmatpush1.bf16.msra.mxu0 %v917
        %983 = vmatprep.subr.bf16.mxu0 %v920
        %984 = vmatpush1.bf16.msra.mxu0 %v919
        %985 = vmatprep.subr.bf16.mxu0 %v922
        %986 = vmatpush1.bf16.msra.mxu0 %v921
        %987 = vmatprep.subr.bf16.mxu0 %v924
        %988 = vmatpush1.bf16.msra.mxu0 %v923
        %989 = vmatprep.subr.bf16.mxu0 %v926
        %990 = vmatpush1.bf16.msra.mxu0 %v925
        %991 = vmatprep.subr.bf16.mxu0 %v928
        %992 = vmatpush1.bf16.msra.mxu0 %v927
        %993 = vmatprep.subr.bf16.mxu0 %v930
        %994 = vmatpush1.bf16.msra.mxu0 %v929
        %995 = vmatprep.subr.bf16.mxu0 %v932
        %996 = vmatpush1.bf16.msra.mxu0 %v931
        %997 = vmatprep.subr.bf16.mxu0 %v934
        %998 = vmatpush1.bf16.msra.mxu0 %v933
        %999 = vmatprep.subr.bf16.mxu0 %v936
        %1000 = vmatpush1.bf16.msra.mxu0 %v935
        %1001 = vmatprep.subr.bf16.mxu0 %v938
        %1002 = vmatpush1.bf16.msra.mxu0 %v937
        %1003 = vmatprep.mubr.bf16.mxu0 %v766
        %1004 = vmatmul.mubr.bf16.gmra.mrb[0].mxu0 %v765
        %v1005 = vpop.f32.mrb[0].mxu0
        %v1006 = vadd.f32 %v804, %v1005
        %v1007 = vpop.f32.mrb[0].mxu0
        %v1008 = vadd.f32 %v808, %v1007
        %v1009 = vpop.f32.mrb[0].mxu0
        %v1010 = vpop.f32.mrb[0].mxu0
        %1011 = vdwg.mxu0
        %v1012 = vmax.f32 %v1006, 0.0
        %v1013 = vmax.f32 %v1008, 0.0
        %v1014 = vpack.c.bf16 %v1012, %v1012
        %v1015 = vpack.c.bf16 %v1013, %v1013
        %v1016 = vld [vmem:[#allocation6] sm:$0xff]
        %v1017 = vld [vmem:[#allocation6 + $0x8] sm:$0xff]
        %v1018 = vld [vmem:[#allocation6 + $0x10] sm:$0xff]
        %v1019 = vld [vmem:[#allocation6 + $0x18] sm:$0xff]
        %v1020 = vld [vmem:[#allocation6 + $0x20] sm:$0xff]
        %v1021 = vld [vmem:[#allocation6 + $0x28] sm:$0xff]
        %v1022 = vld [vmem:[#allocation6 + $0x30] sm:$0xff]
        %v1023 = vld [vmem:[#allocation6 + $0x38] sm:$0xff]
        %v1024 = vld [vmem:[#allocation6 + $0x40] sm:$0xff]
        %v1025 = vld [vmem:[#allocation6 + $0x48] sm:$0xff]
        %v1026 = vld [vmem:[#allocation6 + $0x50] sm:$0xff]
        %v1027 = vld [vmem:[#allocation6 + $0x58] sm:$0xff]
        %v1028 = vld [vmem:[#allocation6 + $0x60] sm:$0xff]
        %v1029 = vld [vmem:[#allocation6 + $0x68] sm:$0xff]
        %v1030 = vld [vmem:[#allocation6 + $0x70] sm:$0xff]
        %v1031 = vld [vmem:[#allocation6 + $0x78] sm:$0xff]
        %v1032 = vld [vmem:[#allocation6 + $0x80] sm:$0xff]
        %v1033 = vld [vmem:[#allocation6 + $0x88] sm:$0xff]
        %v1034 = vld [vmem:[#allocation6 + $0x90] sm:$0xff]
        %v1035 = vld [vmem:[#allocation6 + $0x98] sm:$0xff]
        %v1036 = vld [vmem:[#allocation6 + $0xa0] sm:$0xff]
        %v1037 = vld [vmem:[#allocation6 + $0xa8] sm:$0xff]
        %v1038 = vld [vmem:[#allocation6 + $0xb0] sm:$0xff]
        %v1039 = vld [vmem:[#allocation6 + $0xb8] sm:$0xff]
        %v1040 = vld [vmem:[#allocation6 + $0xc0] sm:$0xff]
        %v1041 = vld [vmem:[#allocation6 + $0xc8] sm:$0xff]
        %v1042 = vld [vmem:[#allocation6 + $0xd0] sm:$0xff]
        %v1043 = vld [vmem:[#allocation6 + $0xd8] sm:$0xff]
        %v1044 = vld [vmem:[#allocation6 + $0xe0] sm:$0xff]
        %v1045 = vld [vmem:[#allocation6 + $0xe8] sm:$0xff]
        %v1046 = vld [vmem:[#allocation6 + $0xf0] sm:$0xff]
        %v1047 = vld [vmem:[#allocation6 + $0xf8] sm:$0xff]
        %v1048 = vld [vmem:[%s8] sm:$0x3]
        %v1050 = vlaneseq
        %v1051 = vshrl.u32 %v1050, 7
        %v1052 = vsub.s32 0, %v1051
        %v1053 = vrot.slane %v1048, %v1052
        %v1054 = vlaneseq
        %v1055 = vshrl.u32 %v1054, 7
        %v1056 = vsub.s32 1, %v1055
        %v1057 = vrot.slane %v1048, %v1056
        %v1092 = vunpack.c.l.b16 %v1016
        %v1093 = vunpack.c.h.b16 %v1016
        %v1094 = vunpack.c.l.b16 %v1017
        %v1095 = vunpack.c.h.b16 %v1017
        %v1096 = vunpack.c.l.b16 %v1018
        %v1097 = vunpack.c.h.b16 %v1018
        %v1098 = vunpack.c.l.b16 %v1019
        %v1099 = vunpack.c.h.b16 %v1019
        %v1100 = vunpack.c.l.b16 %v1020
        %v1101 = vunpack.c.h.b16 %v1020
        %v1102 = vunpack.c.l.b16 %v1021
        %v1103 = vunpack.c.h.b16 %v1021
        %v1104 = vunpack.c.l.b16 %v1022
        %v1105 = vunpack.c.h.b16 %v1022
        %v1106 = vunpack.c.l.b16 %v1023
        %v1107 = vunpack.c.h.b16 %v1023
        %v1108 = vunpack.c.l.b16 %v1024
        %v1109 = vunpack.c.h.b16 %v1024
        %v1110 = vunpack.c.l.b16 %v1025
        %v1111 = vunpack.c.h.b16 %v1025
        %v1112 = vunpack.c.l.b16 %v1026
        %v1113 = vunpack.c.h.b16 %v1026
        %v1114 = vunpack.c.l.b16 %v1027
        %v1115 = vunpack.c.h.b16 %v1027
        %v1116 = vunpack.c.l.b16 %v1028
        %v1117 = vunpack.c.h.b16 %v1028
        %v1118 = vunpack.c.l.b16 %v1029
        %v1119 = vunpack.c.h.b16 %v1029
        %v1120 = vunpack.c.l.b16 %v1030
        %v1121 = vunpack.c.h.b16 %v1030
        %v1122 = vunpack.c.l.b16 %v1031
        %v1123 = vunpack.c.h.b16 %v1031
        %v1124 = vunpack.c.l.b16 %v1032
        %v1125 = vunpack.c.h.b16 %v1032
        %v1126 = vunpack.c.l.b16 %v1033
        %v1127 = vunpack.c.h.b16 %v1033
        %v1128 = vunpack.c.l.b16 %v1034
        %v1129 = vunpack.c.h.b16 %v1034
        %v1130 = vunpack.c.l.b16 %v1035
        %v1131 = vunpack.c.h.b16 %v1035
        %v1132 = vunpack.c.l.b16 %v1036
        %v1133 = vunpack.c.h.b16 %v1036
        %v1134 = vunpack.c.l.b16 %v1037
        %v1135 = vunpack.c.h.b16 %v1037
        %v1136 = vunpack.c.l.b16 %v1038
        %v1137 = vunpack.c.h.b16 %v1038
        %v1138 = vunpack.c.l.b16 %v1039
        %v1139 = vunpack.c.h.b16 %v1039
        %v1140 = vunpack.c.l.b16 %v1040
        %v1141 = vunpack.c.h.b16 %v1040
        %v1142 = vunpack.c.l.b16 %v1041
        %v1143 = vunpack.c.h.b16 %v1041
        %v1144 = vunpack.c.l.b16 %v1042
        %v1145 = vunpack.c.h.b16 %v1042
        %v1146 = vunpack.c.l.b16 %v1043
        %v1147 = vunpack.c.h.b16 %v1043
        %v1148 = vunpack.c.l.b16 %v1044
        %v1149 = vunpack.c.h.b16 %v1044
        %v1150 = vunpack.c.l.b16 %v1045
        %v1151 = vunpack.c.h.b16 %v1045
        %v1152 = vunpack.c.l.b16 %v1046
        %v1153 = vunpack.c.h.b16 %v1046
        %v1154 = vunpack.c.l.b16 %v1047
        %v1155 = vunpack.c.h.b16 %v1047
        %v1156 = vpack.c.b16 %v1094, %v1092
        %v1157 = vpack.c.b16 %v1095, %v1093
        %v1158 = vpack.c.b16 %v1098, %v1096
        %v1159 = vpack.c.b16 %v1099, %v1097
        %v1160 = vpack.c.b16 %v1102, %v1100
        %v1161 = vpack.c.b16 %v1103, %v1101
        %v1162 = vpack.c.b16 %v1106, %v1104
        %v1163 = vpack.c.b16 %v1107, %v1105
        %v1164 = vpack.c.b16 %v1110, %v1108
        %v1165 = vpack.c.b16 %v1111, %v1109
        %v1166 = vpack.c.b16 %v1114, %v1112
        %v1167 = vpack.c.b16 %v1115, %v1113
        %v1168 = vpack.c.b16 %v1118, %v1116
        %v1169 = vpack.c.b16 %v1119, %v1117
        %v1170 = vpack.c.b16 %v1122, %v1120
        %v1171 = vpack.c.b16 %v1123, %v1121
        %v1172 = vpack.c.b16 %v1126, %v1124
        %v1173 = vpack.c.b16 %v1127, %v1125
        %v1174 = vpack.c.b16 %v1130, %v1128
        %v1175 = vpack.c.b16 %v1131, %v1129
        %v1176 = vpack.c.b16 %v1134, %v1132
        %v1177 = vpack.c.b16 %v1135, %v1133
        %v1178 = vpack.c.b16 %v1138, %v1136
        %v1179 = vpack.c.b16 %v1139, %v1137
        %v1180 = vpack.c.b16 %v1142, %v1140
        %v1181 = vpack.c.b16 %v1143, %v1141
        %v1182 = vpack.c.b16 %v1146, %v1144
        %v1183 = vpack.c.b16 %v1147, %v1145
        %v1184 = vpack.c.b16 %v1150, %v1148
        %v1185 = vpack.c.b16 %v1151, %v1149
        %v1186 = vpack.c.b16 %v1154, %v1152
        %v1187 = vpack.c.b16 %v1155, %v1153
        %1220 = vmatprep.subr.bf16.mxu0 %v1157
        %1221 = vmatpush1.bf16.msra.mxu0 %v1156
        %1222 = vmatprep.subr.bf16.mxu0 %v1159
        %1223 = vmatpush1.bf16.msra.mxu0 %v1158
        %1224 = vmatprep.subr.bf16.mxu0 %v1161
        %1225 = vmatpush1.bf16.msra.mxu0 %v1160
        %1226 = vmatprep.subr.bf16.mxu0 %v1163
        %1227 = vmatpush1.bf16.msra.mxu0 %v1162
        %1228 = vmatprep.subr.bf16.mxu0 %v1165
        %1229 = vmatpush1.bf16.msra.mxu0 %v1164
        %1230 = vmatprep.subr.bf16.mxu0 %v1167
        %1231 = vmatpush1.bf16.msra.mxu0 %v1166
        %1232 = vmatprep.subr.bf16.mxu0 %v1169
        %1233 = vmatpush1.bf16.msra.mxu0 %v1168
        %1234 = vmatprep.subr.bf16.mxu0 %v1171
        %1235 = vmatpush1.bf16.msra.mxu0 %v1170
        %1236 = vmatprep.subr.bf16.mxu0 %v1173
        %1237 = vmatpush1.bf16.msra.mxu0 %v1172
        %1238 = vmatprep.subr.bf16.mxu0 %v1175
        %1239 = vmatpush1.bf16.msra.mxu0 %v1174
        %1240 = vmatprep.subr.bf16.mxu0 %v1177
        %1241 = vmatpush1.bf16.msra.mxu0 %v1176
        %1242 = vmatprep.subr.bf16.mxu0 %v1179
        %1243 = vmatpush1.bf16.msra.mxu0 %v1178
        %1244 = vmatprep.subr.bf16.mxu0 %v1181
        %1245 = vmatpush1.bf16.msra.mxu0 %v1180
        %1246 = vmatprep.subr.bf16.mxu0 %v1183
        %1247 = vmatpush1.bf16.msra.mxu0 %v1182
        %1248 = vmatprep.subr.bf16.mxu0 %v1185
        %1249 = vmatpush1.bf16.msra.mxu0 %v1184
        %1250 = vmatprep.subr.bf16.mxu0 %v1187
        %1251 = vmatpush1.bf16.msra.mxu0 %v1186
        %1252 = vmatprep.mubr.bf16.mxu0 %v1015
        %1253 = vmatmul.mubr.bf16.gmra.mrb[0].mxu0 %v1014
        %v1254 = vpop.f32.mrb[0].mxu0
        %v1255 = vadd.f32 %v1053, %v1254
        %v1256 = vpop.f32.mrb[0].mxu0
        %v1257 = vadd.f32 %v1057, %v1256
        %v1258 = vpop.f32.mrb[0].mxu0
        %v1259 = vpop.f32.mrb[0].mxu0
        %1260 = vdwg.mxu0
        %v1261 = vmax.f32 %v1255, 0.0
        %v1262 = vmax.f32 %v1257, 0.0
        %v1263 = vpack.c.bf16 %v1261, %v1261
        %v1264 = vpack.c.bf16 %v1262, %v1262
        %v1265 = vld [vmem:[#allocation7] sm:$0xf]
        %v1266 = vld [vmem:[#allocation7 + $0x4] sm:$0xf]
        %v1267 = vld [vmem:[#allocation7 + $0x8] sm:$0xf]
        %v1268 = vld [vmem:[#allocation7 + $0xc] sm:$0xf]
        %v1269 = vld [vmem:[#allocation7 + $0x10] sm:$0xf]
        %v1270 = vld [vmem:[#allocation7 + $0x14] sm:$0xf]
        %v1271 = vld [vmem:[#allocation7 + $0x18] sm:$0xf]
        %v1272 = vld [vmem:[#allocation7 + $0x1c] sm:$0xf]
        %v1273 = vld [vmem:[#allocation7 + $0x20] sm:$0xf]
        %v1274 = vld [vmem:[#allocation7 + $0x24] sm:$0xf]
        %v1275 = vld [vmem:[#allocation7 + $0x28] sm:$0xf]
        %v1276 = vld [vmem:[#allocation7 + $0x2c] sm:$0xf]
        %v1277 = vld [vmem:[#allocation7 + $0x30] sm:$0xf]
        %v1278 = vld [vmem:[#allocation7 + $0x34] sm:$0xf]
        %v1279 = vld [vmem:[#allocation7 + $0x38] sm:$0xf]
        %v1280 = vld [vmem:[#allocation7 + $0x3c] sm:$0xf]
        %v1281 = vld [vmem:[#allocation7 + $0x40] sm:$0xf]
        %v1282 = vld [vmem:[#allocation7 + $0x44] sm:$0xf]
        %v1283 = vld [vmem:[#allocation7 + $0x48] sm:$0xf]
        %v1284 = vld [vmem:[#allocation7 + $0x4c] sm:$0xf]
        %v1285 = vld [vmem:[#allocation7 + $0x50] sm:$0xf]
        %v1286 = vld [vmem:[#allocation7 + $0x54] sm:$0xf]
        %v1287 = vld [vmem:[#allocation7 + $0x58] sm:$0xf]
        %v1288 = vld [vmem:[#allocation7 + $0x5c] sm:$0xf]
        %v1289 = vld [vmem:[#allocation7 + $0x60] sm:$0xf]
        %v1290 = vld [vmem:[#allocation7 + $0x64] sm:$0xf]
        %v1291 = vld [vmem:[#allocation7 + $0x68] sm:$0xf]
        %v1292 = vld [vmem:[#allocation7 + $0x6c] sm:$0xf]
        %v1293 = vld [vmem:[#allocation7 + $0x70] sm:$0xf]
        %v1294 = vld [vmem:[#allocation7 + $0x74] sm:$0xf]
        %v1295 = vld [vmem:[#allocation7 + $0x78] sm:$0xf]
        %v1296 = vld [vmem:[#allocation7 + $0x7c] sm:$0xf]
        %v1297 = vld [vmem:[%s10] sm:$0x1]
        %v1299 = vlaneseq
        %v1300 = vshrl.u32 %v1299, 7
        %v1301 = vsub.s32 0, %v1300
        %v1302 = vrot.slane %v1297, %v1301
        %v1336 = vunpack.c.l.b16 %v1265
        %v1337 = vunpack.c.l.b16 %v1266
        %v1338 = vunpack.c.l.b16 %v1267
        %v1339 = vunpack.c.l.b16 %v1268
        %v1340 = vunpack.c.l.b16 %v1269
        %v1341 = vunpack.c.l.b16 %v1270
        %v1342 = vunpack.c.l.b16 %v1271
        %v1343 = vunpack.c.l.b16 %v1272
        %v1344 = vunpack.c.l.b16 %v1273
        %v1345 = vunpack.c.l.b16 %v1274
        %v1346 = vunpack.c.l.b16 %v1275
        %v1347 = vunpack.c.l.b16 %v1276
        %v1348 = vunpack.c.l.b16 %v1277
        %v1349 = vunpack.c.l.b16 %v1278
        %v1350 = vunpack.c.l.b16 %v1279
        %v1351 = vunpack.c.l.b16 %v1280
        %v1352 = vunpack.c.l.b16 %v1281
        %v1353 = vunpack.c.l.b16 %v1282
        %v1354 = vunpack.c.l.b16 %v1283
        %v1355 = vunpack.c.l.b16 %v1284
        %v1356 = vunpack.c.l.b16 %v1285
        %v1357 = vunpack.c.l.b16 %v1286
        %v1358 = vunpack.c.l.b16 %v1287
        %v1359 = vunpack.c.l.b16 %v1288
        %v1360 = vunpack.c.l.b16 %v1289
        %v1361 = vunpack.c.l.b16 %v1290
        %v1362 = vunpack.c.l.b16 %v1291
        %v1363 = vunpack.c.l.b16 %v1292
        %v1364 = vunpack.c.l.b16 %v1293
        %v1365 = vunpack.c.l.b16 %v1294
        %v1366 = vunpack.c.l.b16 %v1295
        %v1367 = vunpack.c.l.b16 %v1296
        %v1368 = vpack.c.b16 %v1337, %v1336
        %v1369 = vpack.c.b16 %v1339, %v1338
        %v1370 = vpack.c.b16 %v1341, %v1340
        %v1371 = vpack.c.b16 %v1343, %v1342
        %v1372 = vpack.c.b16 %v1345, %v1344
        %v1373 = vpack.c.b16 %v1347, %v1346
        %v1374 = vpack.c.b16 %v1349, %v1348
        %v1375 = vpack.c.b16 %v1351, %v1350
        %v1376 = vpack.c.b16 %v1353, %v1352
        %v1377 = vpack.c.b16 %v1355, %v1354
        %v1378 = vpack.c.b16 %v1357, %v1356
        %v1379 = vpack.c.b16 %v1359, %v1358
        %v1380 = vpack.c.b16 %v1361, %v1360
        %v1381 = vpack.c.b16 %v1363, %v1362
        %v1382 = vpack.c.b16 %v1365, %v1364
        %v1383 = vpack.c.b16 %v1367, %v1366
        %1400 = vmatprep.subr.bf16.mxu0 0
        %1401 = vmatpush1.bf16.msra.mxu0 %v1368
        %1402 = vmatprep.subr.bf16.mxu0 0
        %1403 = vmatpush1.bf16.msra.mxu0 %v1369
        %1404 = vmatprep.subr.bf16.mxu0 0
        %1405 = vmatpush1.bf16.msra.mxu0 %v1370
        %1406 = vmatprep.subr.bf16.mxu0 0
        %1407 = vmatpush1.bf16.msra.mxu0 %v1371
        %1408 = vmatprep.subr.bf16.mxu0 0
        %1409 = vmatpush1.bf16.msra.mxu0 %v1372
        %1410 = vmatprep.subr.bf16.mxu0 0
        %1411 = vmatpush1.bf16.msra.mxu0 %v1373
        %1412 = vmatprep.subr.bf16.mxu0 0
        %1413 = vmatpush1.bf16.msra.mxu0 %v1374
        %1414 = vmatprep.subr.bf16.mxu0 0
        %1415 = vmatpush1.bf16.msra.mxu0 %v1375
        %1416 = vmatprep.subr.bf16.mxu0 0
        %1417 = vmatpush1.bf16.msra.mxu0 %v1376
        %1418 = vmatprep.subr.bf16.mxu0 0
        %1419 = vmatpush1.bf16.msra.mxu0 %v1377
        %1420 = vmatprep.subr.bf16.mxu0 0
        %1421 = vmatpush1.bf16.msra.mxu0 %v1378
        %1422 = vmatprep.subr.bf16.mxu0 0
        %1423 = vmatpush1.bf16.msra.mxu0 %v1379
        %1424 = vmatprep.subr.bf16.mxu0 0
        %1425 = vmatpush1.bf16.msra.mxu0 %v1380
        %1426 = vmatprep.subr.bf16.mxu0 0
        %1427 = vmatpush1.bf16.msra.mxu0 %v1381
        %1428 = vmatprep.subr.bf16.mxu0 0
        %1429 = vmatpush1.bf16.msra.mxu0 %v1382
        %1430 = vmatprep.subr.bf16.mxu0 0
        %1431 = vmatpush1.bf16.msra.mxu0 %v1383
        %1432 = vmatprep.mubr.bf16.mxu0 %v1264
        %1433 = vmatmul.mubr.bf16.gmra.mrb[0].mxu0 %v1263
        %v1434 = vpop.f32.mrb[0].mxu0
        %v1435 = vadd.f32 %v1302, %v1434
        %v1436 = vpop.f32.mrb[0].mxu0
        %v1437 = vpop.f32.mrb[0].mxu0
        %v1438 = vpop.f32.mrb[0].mxu0
        %1439 = vdwg.mxu0
        %vm1440 = vcmask 31744
        %1441 = vst.msk [vmem:[%s440] sm:$0xff] %vm1440, %v1435
        %p1442 = scmp.lt.s32.totalorder %s25, 1
        %s1443 = scalar_select %p1442, %s25, 1
        %s1444 = smul.addr %s1443, 8
        %s1445 = scalar_lea.vmem %s11, %s1444
        // Predicated region
        $region81: #{_dqn_forward.1} parent=63 // pred_check
          %p1446 = pneg %p279
        $region82: #{_dqn_forward.1} parent=63 // pred_check_branch
          %1448 = sbr.rel (%p1446) target = $region84
        $region83: #{_dqn_forward.1} parent=63 // pred_region
          _
        $region84: #{_dqn_forward.1} parent=63 // pred_fallthru
          _
      $region64: #{_dqn_forward.1} parent=5 // pred_fallthru
        _
      %p1449 = scmp.le.s32.totalorder 2, %s20
      // Predicated region
      $region85: #{_dqn_forward.1} parent=5 // pred_check
        %p1450 = pneg %p1449
      $region86: #{_dqn_forward.1} parent=5 // pred_check_branch
        %1452 = sbr.rel (%p1450) target = $region88
      $region87: #{_dqn_forward.1} parent=5 // pred_region
        %s1453 = ssub.s32 %s20, 2
        // Predicated region
        $region89: #{_dqn_forward.1} parent=87 // pred_check
          %p1454 = pneg %p285
        $region90: #{_dqn_forward.1} parent=87 // pred_check_branch
          %1456 = sbr.rel (%p1454) target = $region92
        $region91: #{_dqn_forward.1} parent=87 // pred_region
          %p1457 = scmp.lt.s32.totalorder %s26, 1
          %s1458 = scalar_select %p1457, %s26, 1
          %s1459 = smul.addr %s1458, 8
          %s1460 = scalar_lea.vmem %s11, %s1459
        $region92: #{_dqn_forward.1} parent=87 // pred_fallthru
          _
      $region88: #{_dqn_forward.1} parent=5 // pred_fallthru
        _
    $region6: #{_dqn_forward.1} parent=1 // loop_footer
      %s24 = sadd.s32 1, %s20
    $region7: #{_dqn_forward.1} parent=1 // loop_footer_branch
      %19 = sbr.rel target = $region3
    $region8: #{_dqn_forward.1} parent=1 // loop_exit
      _
    %1461 = vsyncpa [#allocation3], 1
    %s1462 = scalar_lea.sflag [#allocation3], 1
    %1463 = vsyncpa %s1462, 1
    %1464 = vsyncpa [#allocation5], 1
    %1465 = vsyncpa [#allocation8], 1

</llo_original>
